<compile_context>
chip_gen: v6e
topology: v6e:2x2x1
jax: 0.10.0
libtpu: 0.0.40
codegen_flags: <defaults>
</compile_context>

<pallas_src>
import jax
import jax.numpy as jnp
from jax.experimental import pallas as pl
from jax.experimental.pallas import tpu as pltpu


# Below this size an XLA copy is strictly faster than launching a kernel.
_SMALL_BYPASS_BYTES = 1 << 20  # 1 MiB

# Only bother splitting the copy into multiple DMAs above this size.
_CHUNK_THRESHOLD_BYTES = 32 << 20  # 32 MiB


def _make_dma_copy_kernel(n_chunks: int, chunk_rows: int):
    """Build an HBM->HBM copy kernel issuing `n_chunks` overlapped DMAs."""

    def kernel(x_hbm, o_hbm, sems):
        if n_chunks == 1:
            cp = pltpu.make_async_copy(x_hbm, o_hbm, sems.at[0])
            cp.start()
            cp.wait()
            return
        copies = []
        for c in range(n_chunks):  # static Python loop; offsets are compile-time
            lo = c * chunk_rows
            cp = pltpu.make_async_copy(
                x_hbm.at[pl.ds(lo, chunk_rows)],
                o_hbm.at[pl.ds(lo, chunk_rows)],
                sems.at[c],
            )
            cp.start()
            copies.append(cp)
        for cp in copies:
            cp.wait()

    return kernel


def _pick_n_chunks(x: jax.Array) -> int:
    """Split very large copies into a few DMAs on alternating semaphores."""
    if x.ndim == 0 or x.nbytes < _CHUNK_THRESHOLD_BYTES:
        return 1
    leading = x.shape[0]
    for c in (4, 2):
        if leading % c == 0:
            return c
    return 1


def _dma_copy(x: jax.Array, n_chunks: int | None = None) -> jax.Array:
    """Materialized identity via a direct HBM->HBM DMA (no VMEM round-trip)."""
    orig_shape = x.shape
    if x.ndim == 0:
        x = x.reshape(1)

    if n_chunks is None:
        n_chunks = _pick_n_chunks(x)
    leading = x.shape[0]
    if n_chunks < 1 or leading % n_chunks != 0:
        n_chunks = 1
    chunk_rows = leading // n_chunks

    out = pl.pallas_call(
        _make_dma_copy_kernel(n_chunks, chunk_rows),
        out_shape=jax.ShapeDtypeStruct(x.shape, x.dtype),
        # Keep both operands in HBM; the DMA engine does the whole copy.
        in_specs=[pl.BlockSpec(memory_space=pl.ANY)],
        out_specs=pl.BlockSpec(memory_space=pl.ANY),
        scratch_shapes=[pltpu.SemaphoreType.DMA((n_chunks,))],
        # Pure mem-bound copy: read + write of the whole array.
        cost_estimate=pl.CostEstimate(
            flops=0,
            transcendentals=0,
            bytes_accessed=2 * x.size * x.dtype.itemsize,
        ),
    )(x)

    return out.reshape(orig_shape)


def empty_layer_forward(
    x: jax.Array,
    materialize: bool = True,
    *,
    min_pallas_bytes: int = _SMALL_BYPASS_BYTES,
    n_chunks: int | None = None,
) -> jax.Array:
    """Identity pass-through (EmptyLayer placeholder).

    materialize=False: zero-cost identity; returns (aliases) the input buffer.
    materialize=True : distinct output buffer.  Small tensors use a plain XLA
                       copy; large tensors use a Pallas HBM->HBM DMA kernel.
    """
    if not materialize:
        # EmptyLayer is an identity; the cheapest correct implementation.
        return x

    if x.size == 0 or x.nbytes < min_pallas_bytes:
        # Kernel launch overhead dominates tiny tensors; let XLA copy it.
        return jnp.copy(x)

    return _dma_copy(x, n_chunks=n_chunks)


if __name__ == "__main__":
    key = jax.random.PRNGKey(0)
    # Small NCHW input consistent with a conv-net feature map.
    x = jax.random.normal(key, (2, 4, 16, 16), dtype=jnp.float32)

    # Force the Pallas HBM->HBM DMA path (single DMA) on the small demo input.
    y = empty_layer_forward(x, materialize=True, min_pallas_bytes=0)
    y = jax.block_until_ready(y)
    assert y.shape == x.shape
    assert y.dtype == x.dtype
    assert bool(jnp.all(y == x))

    # Chunked-DMA variant (2 overlapped DMAs on separate semaphores).
    y2 = empty_layer_forward(x, materialize=True, min_pallas_bytes=0, n_chunks=2)
    y2 = jax.block_until_ready(y2)
    assert bool(jnp.all(y2 == x))

    # Default path: small tensor -> XLA bypass; still an identity.
    y3 = jax.block_until_ready(empty_layer_forward(x, materialize=True))
    assert bool(jnp.all(y3 == x))

    # Zero-cost path (recommended for production) aliases the input.
    z = empty_layer_forward(x, materialize=False)
    assert z is x

    print("KERNEL_OK")
</pallas_src>

<mosaic_0001>
module attributes {stable_mosaic.version = 11 : i64} {
  func.func @kernel(%arg0: memref<2x4x16x16xf32, #tpu.memory_space<any>>, %arg1: memref<2x4x16x16xf32, #tpu.memory_space<any>>, %arg2: memref<1x!tpu.dma_semaphore, #tpu.memory_space<semaphore_mem>>) attributes {dimension_semantics = [], scalar_prefetch = 0 : i64, scratch_operands = 1 : i64, tpu.core_type = #tpu.core_type<tc>} {
    %c0_i32 = arith.constant 0 : i32
    %0 = tpu.memref_slice %arg2[%c0_i32] : memref<1x!tpu.dma_semaphore, #tpu.memory_space<semaphore_mem>> -> memref<1x!tpu.dma_semaphore, #tpu.memory_space<semaphore_mem>>
    %1 = tpu.memref_squeeze %0 : memref<1x!tpu.dma_semaphore, #tpu.memory_space<semaphore_mem>> -> memref<!tpu.dma_semaphore, #tpu.memory_space<semaphore_mem>>
    tpu.enqueue_dma source(%arg0 : memref<2x4x16x16xf32, #tpu.memory_space<any>>) target(%arg1 : memref<2x4x16x16xf32, #tpu.memory_space<any>>) target_semaphore(%1 : memref<!tpu.dma_semaphore, #tpu.memory_space<semaphore_mem>>)
    %c0_i32_0 = arith.constant 0 : i32
    %2 = tpu.memref_slice %arg2[%c0_i32_0] : memref<1x!tpu.dma_semaphore, #tpu.memory_space<semaphore_mem>> -> memref<1x!tpu.dma_semaphore, #tpu.memory_space<semaphore_mem>>
    %3 = tpu.memref_squeeze %2 : memref<1x!tpu.dma_semaphore, #tpu.memory_space<semaphore_mem>> -> memref<!tpu.dma_semaphore, #tpu.memory_space<semaphore_mem>>
    tpu.wait_dma2 semaphore(%3 : memref<!tpu.dma_semaphore, #tpu.memory_space<semaphore_mem>>) src(%arg0 : memref<2x4x16x16xf32, #tpu.memory_space<any>>) dst(%arg1 : memref<2x4x16x16xf32, #tpu.memory_space<any>>)
    return
  }
}

</mosaic_0001>

<llo_original>
// kernel: tpu_custom_call.1
$region0: #{tpu_custom_call.1}
  #allocation0 [shape = 'u32[]', space=smem, size = 0x4, offset = 0x4, fixed_abs, tag = 'smem constant byte address 0x4 - core index']
  #allocation1 [shape = 'u32[144,128]{1,0:T(1,128)}', space=vmem, size = 0x12000, scoped, tag = 'internal scratch']
  #allocation2 [shape = 's32[1]{0}', space=sflag, size = 0x4, scoped, tag = 'scratch operand']
  #allocation3 [shape = 's32[]', space=sflag, size = 0x4, offset = 0, fixed_abs, tag = 'sflag constant byte address 0x0 - dummy sync flag']
  #allocation4 [shape = 'u32[0]{0}', space=smem, size = 0, offset = 0, fixed_abs, tag = 'smem constant byte address 0x0 - null']
  %s0 = inlined_call_operand.hbm [shape: f32[2,4,16,16], index: 0, kind: input, shape index: {}]
  %s1 = inlined_call_operand.hbm [shape: f32[2,4,16,16], index: 1, kind: output, shape index: {}]
  %s2 = sld [smem:[#allocation0]]
  $region2: #{tpu_custom_call.1} parent=0
    _
  %s4 = ssub.s32 1, %s2
  %s5 = scalar_select 0, %s4, %s2
  %s7 = sshll.u32 1, 14
  %s8 = sxor.u32 4294967295, %s7
  %12 = dma.general %s0, 2048, %s1, [#allocation2], 131072, [#allocation4], 0, 0
  %s13 = smul.u32 2, 4
  %s14 = smul.u32 %s13, 16
  %s15 = smul.u32 %s14, 1
  %s16 = sshll.u32 %s15, 4
  %17 = dma.done [#allocation2], %s16
  %18 = vsyncmov [#allocation2]
  %s19 = vpop.sfrf %18
  %p20 = scmp.eq.s32.totalorder %s19, 0
  %p21 = pneg %p20
  %23 = shalt.err (%p21)

</llo_original>
